<compile_context>
chip_gen: v7x
topology: tpu7x:2x2x1
jax: 0.10.0
libtpu: 0.0.40
codegen_flags: <defaults>
</compile_context>

<pallas_src>
import jax
import jax.numpy as jnp
from jax.experimental import pallas as pl
from jax.experimental.pallas import tpu as pltpu
import numpy as np

_LEAKY_SLOPE = 0.01
_BN_EPS = 1e-5


def _round_up(n, m):
    return ((n + m - 1) // m) * m


def _critic_kernel(x_ref, scale_ref, shift_ref,
                   w1_ref, b1_ref, w2_ref, b2_ref, w3_ref, b3_ref, o_ref):
    """One batch tile: BN apply (VPU, f32) + 3 MXU matmuls + leaky_relu."""
    # BatchNorm apply in f32 (scale/shift precomputed from batch stats).
    xn = x_ref[...] * scale_ref[...] + shift_ref[...]

    h1 = jnp.dot(xn.astype(w1_ref.dtype), w1_ref[...],
                 preferred_element_type=jnp.float32) + b1_ref[...]
    h1 = jnp.where(h1 > 0, h1, _LEAKY_SLOPE * h1)

    h2 = jnp.dot(h1.astype(w2_ref.dtype), w2_ref[...],
                 preferred_element_type=jnp.float32) + b2_ref[...]
    h2 = jnp.where(h2 > 0, h2, _LEAKY_SLOPE * h2)

    o = jnp.dot(h2.astype(w3_ref.dtype), w3_ref[...],
                preferred_element_type=jnp.float32) + b3_ref[...]
    o_ref[...] = o.astype(o_ref.dtype)


def _vmem_limit_bytes(TB, F, H1, H2, OP, mm_itemsize, out_itemsize):
    """Rough scoped-VMEM budget: streamed tiles + resident weights, all x2
    (Pallas double-buffers every input), plus slack; clamped to [32, 64] MiB."""
    stream = TB * F * 4 + TB * OP * out_itemsize
    resident = (2 * F * 4                                     # scale, shift
                + F * H1 * mm_itemsize + H1 * 4               # w1, b1
                + H1 * H2 * mm_itemsize + H2 * 4               # w2, b2
                + H2 * OP * mm_itemsize + OP * 4)              # w3, b3
    est = int(2 * (stream + resident) * 1.5) + (2 << 20)
    return min(max(est, 32 << 20), 64 << 20)


def discrete_critic_forward(x, params, *, batch_tile=512,
                            matmul_dtype=jnp.bfloat16, interpret=False):
    """x: (B, input_size) or (input_size,) float32.  params: dict (see init_params)."""
    squeeze = (x.ndim == 1)
    if squeeze:
        x = x[None, :]
    x = x.astype(jnp.float32)

    B, F = x.shape
    H1 = params["w1"].shape[1]
    H2 = params["w2"].shape[1]
    out_size = params["w3"].shape[1]

    matmul_dtype = jnp.dtype(matmul_dtype)
    out_dtype = jnp.bfloat16 if matmul_dtype == jnp.dtype(jnp.bfloat16) else jnp.float32

    # --- BatchNorm1d (training-mode batch stats, biased var) as tiny XLA ops ---
    mean = jnp.mean(x, axis=0, keepdims=True)                      # (1, F)
    centered = x - mean
    var = jnp.mean(centered * centered, axis=0, keepdims=True)     # biased
    inv_std = jax.lax.rsqrt(var + _BN_EPS)
    scale = (params["gamma"] * inv_std).astype(jnp.float32)        # (1, F)
    shift = (params["beta"] - mean * params["gamma"] * inv_std).astype(jnp.float32)

    w1 = params["w1"].astype(matmul_dtype)
    b1 = params["b1"].astype(jnp.float32)
    w2 = params["w2"].astype(matmul_dtype)
    b2 = params["b2"].astype(jnp.float32)

    # Lane-dense output: pad fc3 columns to a multiple of 128 (unmasked vst).
    OP = _round_up(max(out_size, 128), 128)
    w3_pad = jnp.zeros((H2, OP), matmul_dtype).at[:, :out_size].set(
        params["w3"].astype(matmul_dtype))
    b3_pad = jnp.zeros((1, OP), jnp.float32).at[:, :out_size].set(
        params["b3"].astype(jnp.float32))

    # Batch tile: large (overhead-amortizing) but keep >= ~4 grid steps when the
    # batch allows it so megacore ("parallel") sharding engages on v7x.
    batch_tile = max(8, _round_up(batch_tile, 8))
    PB0 = _round_up(B, 8)
    tb_cap = max(8, _round_up((PB0 + 3) // 4, 8))
    TB = min(batch_tile, tb_cap, PB0)
    PB = _round_up(B, TB)

    x_in = x  # kernel consumes f32 x (F is tiny; BN applied in-kernel in f32)
    if PB != B:  # conditional pad only (avoid an extra HBM pass when possible)
        x_in = jnp.pad(x_in, ((0, PB - B), (0, 0)))

    resident = lambda i: (0, 0)  # constant index_map -> stays in VMEM across steps

    out = pl.pallas_call(
        _critic_kernel,
        out_shape=jax.ShapeDtypeStruct((PB, OP), out_dtype),
        grid=(PB // TB,),
        in_specs=[
            pl.BlockSpec((TB, F), lambda i: (i, 0)),   # x: streamed over batch
            pl.BlockSpec((1, F), resident),            # BN scale
            pl.BlockSpec((1, F), resident),            # BN shift
            pl.BlockSpec((F, H1), resident),
            pl.BlockSpec((1, H1), resident),
            pl.BlockSpec((H1, H2), resident),
            pl.BlockSpec((1, H2), resident),
            pl.BlockSpec((H2, OP), resident),
            pl.BlockSpec((1, OP), resident),
        ],
        out_specs=pl.BlockSpec((TB, OP), lambda i: (i, 0)),
        compiler_params=pltpu.CompilerParams(
            dimension_semantics=("parallel",),          # megacore-shard batch (v7x)
            vmem_limit_bytes=_vmem_limit_bytes(
                TB, F, H1, H2, OP, matmul_dtype.itemsize,
                jnp.dtype(out_dtype).itemsize),
        ),
        interpret=interpret,
    )(x_in, scale, shift, w1, b1, w2, b2, w3_pad, b3_pad)

    out = out[:B, :out_size].astype(jnp.float32)
    if squeeze:
        out = out[0]
    return out


def init_params(key, input_size, out_size, fc_hidden_units=(256, 256)):
    """Deterministic init mirroring DiscreteCritic.__init__/reset_parameters.

    Note: hidden_init uses weight.size()[0] == out_features as 'fan_in'
    (faithfully reproduced).  fc1/fc2 biases keep PyTorch's default Linear
    bias init (uniform +/- 1/sqrt(in_features)); fc3 bias is filled with 1.0.
    Weights are stored transposed: (in, out).
    """
    h1, h2 = fc_hidden_units
    k1, k2, k3, kb1, kb2 = jax.random.split(key, 5)

    lim1 = 1.0 / np.sqrt(h1)          # fc1.weight.size()[0] == h1
    lim2 = 1.0 / np.sqrt(h2)          # fc2.weight.size()[0] == h2
    lim3 = 0.003
    blim1 = 1.0 / np.sqrt(input_size)
    blim2 = 1.0 / np.sqrt(h1)

    return {
        "w1": jax.random.uniform(k1, (input_size, h1), jnp.float32, -lim1, lim1),
        "b1": jax.random.uniform(kb1, (1, h1), jnp.float32, -blim1, blim1),
        "w2": jax.random.uniform(k2, (h1, h2), jnp.float32, -lim2, lim2),
        "b2": jax.random.uniform(kb2, (1, h2), jnp.float32, -blim2, blim2),
        "w3": jax.random.uniform(k3, (h2, out_size), jnp.float32, -lim3, lim3),
        "b3": jnp.full((1, out_size), 1.0, jnp.float32),   # fc3.bias.fill_(1.0)
        # BatchNorm1d affine params: weight=1, bias=0
        "gamma": jnp.ones((1, input_size), jnp.float32),
        "beta": jnp.zeros((1, input_size), jnp.float32),
    }


def _reference_forward(x, params):
    """Pure-JAX reference (BatchNorm training-mode, un-fused) for verification."""
    mean = jnp.mean(x, axis=0, keepdims=True)
    var = jnp.mean((x - mean) ** 2, axis=0, keepdims=True)
    xn = (x - mean) / jnp.sqrt(var + _BN_EPS) * params["gamma"] + params["beta"]
    h1 = xn @ params["w1"] + params["b1"]
    h1 = jnp.where(h1 > 0, h1, _LEAKY_SLOPE * h1)
    h2 = h1 @ params["w2"] + params["b2"]
    h2 = jnp.where(h2 > 0, h2, _LEAKY_SLOPE * h2)
    return h2 @ params["w3"] + params["b3"]


if __name__ == "__main__":
    key = jax.random.PRNGKey(0)
    kx, kx2, kp = jax.random.split(key, 3)

    batch = 8
    input_size = 32
    out_size = 4
    fc_hidden_units = (256, 256)

    x = jax.random.normal(kx, (batch, input_size), jnp.float32)
    params = init_params(kp, input_size, out_size, fc_hidden_units)

    # Exact-precision path (f32 MXU operands): tight check vs pure-JAX reference.
    fwd_f32 = jax.jit(lambda a, p: discrete_critic_forward(a, p, matmul_dtype=jnp.float32))
    out_f32 = jax.block_until_ready(fwd_f32(x, params))
    ref = _reference_forward(x, params)
    np.testing.assert_allclose(np.asarray(out_f32), np.asarray(ref),
                               rtol=2e-5, atol=2e-5)

    # Default fast path (bf16 MXU operands, bf16 writeback): loose check.
    fwd = jax.jit(lambda a, p: discrete_critic_forward(a, p))
    out_bf16 = jax.block_until_ready(fwd(x, params))
    np.testing.assert_allclose(np.asarray(out_bf16), np.asarray(ref),
                               rtol=3e-2, atol=3e-2)

    # Exercise multi-step grid + conditional batch padding (B=40 -> 3 tiles of 16).
    x_big = jax.random.normal(kx2, (40, input_size), jnp.float32)
    out_big = jax.block_until_ready(fwd(x_big, params))
    ref_big = _reference_forward(x_big, params)
    np.testing.assert_allclose(np.asarray(out_big), np.asarray(ref_big),
                               rtol=3e-2, atol=3e-2)

    print("KERNEL_OK")
</pallas_src>

<mosaic_0001>
module attributes {stable_mosaic.version = 11 : i64} {
  func.func @_critic_kernel(%arg0: i32, %arg1: memref<8x32xf32, #tpu.memory_space<vmem>>, %arg2: memref<1x32xf32, #tpu.memory_space<vmem>>, %arg3: memref<1x32xf32, #tpu.memory_space<vmem>>, %arg4: memref<32x256xf32, #tpu.memory_space<vmem>>, %arg5: memref<1x256xf32, #tpu.memory_space<vmem>>, %arg6: memref<256x256xf32, #tpu.memory_space<vmem>>, %arg7: memref<1x256xf32, #tpu.memory_space<vmem>>, %arg8: memref<256x128xf32, #tpu.memory_space<vmem>>, %arg9: memref<1x128xf32, #tpu.memory_space<vmem>>, %arg10: memref<8x128xf32, #tpu.memory_space<vmem>>) attributes {dimension_semantics = [#tpu.dimension_semantics<parallel>], iteration_bounds = array<i64: 1>, scalar_prefetch = 0 : i64, scratch_operands = 0 : i64, tpu.core_type = #tpu.core_type<tc>, window_params = [{transform_indices = @transform_0, window_bounds = array<i64: 8, 32>}, {pipeline_mode = #tpu.pipeline_mode<synchronous>, transform_indices = @transform_1, window_bounds = array<i64: 1, 32>}, {pipeline_mode = #tpu.pipeline_mode<synchronous>, transform_indices = @transform_2, window_bounds = array<i64: 1, 32>}, {pipeline_mode = #tpu.pipeline_mode<synchronous>, transform_indices = @transform_3, window_bounds = array<i64: 32, 256>}, {pipeline_mode = #tpu.pipeline_mode<synchronous>, transform_indices = @transform_4, window_bounds = array<i64: 1, 256>}, {pipeline_mode = #tpu.pipeline_mode<synchronous>, transform_indices = @transform_5, window_bounds = array<i64: 256, 256>}, {pipeline_mode = #tpu.pipeline_mode<synchronous>, transform_indices = @transform_6, window_bounds = array<i64: 1, 256>}, {pipeline_mode = #tpu.pipeline_mode<synchronous>, transform_indices = @transform_7, window_bounds = array<i64: 256, 128>}, {pipeline_mode = #tpu.pipeline_mode<synchronous>, transform_indices = @transform_8, window_bounds = array<i64: 1, 128>}, {transform_indices = @transform_9, window_bounds = array<i64: 8, 128>}]} {
    %c0 = arith.constant 0 : index
    %c0_0 = arith.constant 0 : index
    %0 = vector.load %arg1[%c0, %c0_0] : memref<8x32xf32, #tpu.memory_space<vmem>>, vector<8x32xf32>
    %c0_1 = arith.constant 0 : index
    %c0_2 = arith.constant 0 : index
    %1 = vector.load %arg2[%c0_1, %c0_2] : memref<1x32xf32, #tpu.memory_space<vmem>>, vector<1x32xf32>
    %2 = vector.broadcast %1 : vector<1x32xf32> to vector<8x32xf32>
    %3 = arith.mulf %0, %2 : vector<8x32xf32>
    %c0_3 = arith.constant 0 : index
    %c0_4 = arith.constant 0 : index
    %4 = vector.load %arg3[%c0_3, %c0_4] : memref<1x32xf32, #tpu.memory_space<vmem>>, vector<1x32xf32>
    %5 = vector.broadcast %4 : vector<1x32xf32> to vector<8x32xf32>
    %6 = arith.addf %3, %5 : vector<8x32xf32>
    %c0_5 = arith.constant 0 : index
    %c0_6 = arith.constant 0 : index
    %7 = vector.load %arg4[%c0_5, %c0_6] : memref<32x256xf32, #tpu.memory_space<vmem>>, vector<32x256xf32>
    %cst = arith.constant dense<0.000000e+00> : vector<8x256xf32>
    %8 = tpu.matmul %6, %7, %cst {dimension_numbers = #tpu.dot_dimension_numbers<[1], [0], [0], [1], [0, 0, 1, 1], [], []>} : vector<8x32xf32>, vector<32x256xf32>, vector<8x256xf32> -> vector<8x256xf32>
    %c0_7 = arith.constant 0 : index
    %c0_8 = arith.constant 0 : index
    %9 = vector.load %arg5[%c0_7, %c0_8] : memref<1x256xf32, #tpu.memory_space<vmem>>, vector<1x256xf32>
    %10 = vector.broadcast %9 : vector<1x256xf32> to vector<8x256xf32>
    %11 = arith.addf %8, %10 : vector<8x256xf32>
    %cst_9 = arith.constant 0.000000e+00 : f32
    %12 = vector.broadcast %cst_9 : f32 to vector<8x256xf32>
    %13 = arith.cmpf ogt, %11, %12 : vector<8x256xf32>
    %cst_10 = arith.constant 0.00999999977 : f32
    %14 = vector.broadcast %cst_10 : f32 to vector<8x256xf32>
    %15 = arith.mulf %14, %11 : vector<8x256xf32>
    %16 = arith.select %13, %11, %15 : vector<8x256xi1>, vector<8x256xf32>
    %c0_11 = arith.constant 0 : index
    %c0_12 = arith.constant 0 : index
    %17 = vector.load %arg6[%c0_11, %c0_12] : memref<256x256xf32, #tpu.memory_space<vmem>>, vector<256x256xf32>
    %cst_13 = arith.constant dense<0.000000e+00> : vector<8x256xf32>
    %18 = tpu.matmul %16, %17, %cst_13 {dimension_numbers = #tpu.dot_dimension_numbers<[1], [0], [0], [1], [0, 0, 1, 1], [], []>} : vector<8x256xf32>, vector<256x256xf32>, vector<8x256xf32> -> vector<8x256xf32>
    %c0_14 = arith.constant 0 : index
    %c0_15 = arith.constant 0 : index
    %19 = vector.load %arg7[%c0_14, %c0_15] : memref<1x256xf32, #tpu.memory_space<vmem>>, vector<1x256xf32>
    %20 = vector.broadcast %19 : vector<1x256xf32> to vector<8x256xf32>
    %21 = arith.addf %18, %20 : vector<8x256xf32>
    %cst_16 = arith.constant 0.000000e+00 : f32
    %22 = vector.broadcast %cst_16 : f32 to vector<8x256xf32>
    %23 = arith.cmpf ogt, %21, %22 : vector<8x256xf32>
    %cst_17 = arith.constant 0.00999999977 : f32
    %24 = vector.broadcast %cst_17 : f32 to vector<8x256xf32>
    %25 = arith.mulf %24, %21 : vector<8x256xf32>
    %26 = arith.select %23, %21, %25 : vector<8x256xi1>, vector<8x256xf32>
    %c0_18 = arith.constant 0 : index
    %c0_19 = arith.constant 0 : index
    %27 = vector.load %arg8[%c0_18, %c0_19] : memref<256x128xf32, #tpu.memory_space<vmem>>, vector<256x128xf32>
    %cst_20 = arith.constant dense<0.000000e+00> : vector<8x128xf32>
    %28 = tpu.matmul %26, %27, %cst_20 {dimension_numbers = #tpu.dot_dimension_numbers<[1], [0], [0], [1], [0, 0, 1, 1], [], []>} : vector<8x256xf32>, vector<256x128xf32>, vector<8x128xf32> -> vector<8x128xf32>
    %c0_21 = arith.constant 0 : index
    %c0_22 = arith.constant 0 : index
    %29 = vector.load %arg9[%c0_21, %c0_22] : memref<1x128xf32, #tpu.memory_space<vmem>>, vector<1x128xf32>
    %30 = vector.broadcast %29 : vector<1x128xf32> to vector<8x128xf32>
    %31 = arith.addf %28, %30 : vector<8x128xf32>
    %c0_23 = arith.constant 0 : index
    %c0_24 = arith.constant 0 : index
    %32 = vector.load %arg10[%c0_23, %c0_24] : memref<8x128xf32, #tpu.memory_space<vmem>>, vector<8x128xf32>
    tpu.vector_store %arg10[%c0_23, %c0_24], %31 {strides = array<i32>} : memref<8x128xf32, #tpu.memory_space<vmem>>, vector<8x128xf32>,
    return
  }
  func.func @transform_0(%arg0: i32) -> (i32, i32) {
    %c0_i32 = arith.constant 0 : i32
    %c0_i32_0 = arith.constant 0 : i32
    return %arg0, %c0_i32 : i32, i32
  }
  func.func @transform_1(%arg0: i32) -> (i32, i32) {
    %c0_i32 = arith.constant 0 : i32
    %c0_i32_0 = arith.constant 0 : i32
    %c0_i32_1 = arith.constant 0 : i32
    return %c0_i32, %c0_i32_0 : i32, i32
  }
  func.func @transform_2(%arg0: i32) -> (i32, i32) {
    %c0_i32 = arith.constant 0 : i32
    %c0_i32_0 = arith.constant 0 : i32
    %c0_i32_1 = arith.constant 0 : i32
    return %c0_i32, %c0_i32_0 : i32, i32
  }
  func.func @transform_3(%arg0: i32) -> (i32, i32) {
    %c0_i32 = arith.constant 0 : i32
    %c0_i32_0 = arith.constant 0 : i32
    %c0_i32_1 = arith.constant 0 : i32
    return %c0_i32, %c0_i32_0 : i32, i32
  }
  func.func @transform_4(%arg0: i32) -> (i32, i32) {
    %c0_i32 = arith.constant 0 : i32
    %c0_i32_0 = arith.constant 0 : i32
    %c0_i32_1 = arith.constant 0 : i32
    return %c0_i32, %c0_i32_0 : i32, i32
  }
  func.func @transform_5(%arg0: i32) -> (i32, i32) {
    %c0_i32 = arith.constant 0 : i32
    %c0_i32_0 = arith.constant 0 : i32
    %c0_i32_1 = arith.constant 0 : i32
    return %c0_i32, %c0_i32_0 : i32, i32
  }
  func.func @transform_6(%arg0: i32) -> (i32, i32) {
    %c0_i32 = arith.constant 0 : i32
    %c0_i32_0 = arith.constant 0 : i32
    %c0_i32_1 = arith.constant 0 : i32
    return %c0_i32, %c0_i32_0 : i32, i32
  }
  func.func @transform_7(%arg0: i32) -> (i32, i32) {
    %c0_i32 = arith.constant 0 : i32
    %c0_i32_0 = arith.constant 0 : i32
    %c0_i32_1 = arith.constant 0 : i32
    return %c0_i32, %c0_i32_0 : i32, i32
  }
  func.func @transform_8(%arg0: i32) -> (i32, i32) {
    %c0_i32 = arith.constant 0 : i32
    %c0_i32_0 = arith.constant 0 : i32
    %c0_i32_1 = arith.constant 0 : i32
    return %c0_i32, %c0_i32_0 : i32, i32
  }
  func.func @transform_9(%arg0: i32) -> (i32, i32) {
    %c0_i32 = arith.constant 0 : i32
    %c0_i32_0 = arith.constant 0 : i32
    return %arg0, %c0_i32 : i32, i32
  }
}

</mosaic_0001>

<llo_original>
// kernel: _lambda_.1
$region0: #{_lambda_.1}
  #allocation0 [shape = 'u32[]', space=smem, size = 0x4, offset = 0x4, fixed_abs, tag = 'smem constant byte address 0x4 - core index']
  #allocation1 [shape = 'u32[144,128]{1,0:T(1,128)}', space=vmem, size = 0x12000, scoped, tag = 'internal scratch']
  %s0 = inlined_call_operand.vmem [shape: f32[8,32], index: 0, kind: input, shape index: {}]
  %s1 = inlined_call_operand.vmem [shape: f32[1,32], index: 1, kind: input, shape index: {}]
  %s2 = inlined_call_operand.vmem [shape: f32[1,32], index: 2, kind: input, shape index: {}]
  %s3 = inlined_call_operand.vmem [shape: f32[32,256], index: 3, kind: input, shape index: {}]
  %s4 = inlined_call_operand.vmem [shape: f32[1,256], index: 4, kind: input, shape index: {}]
  %s5 = inlined_call_operand.vmem [shape: f32[256,256], index: 5, kind: input, shape index: {}]
  %s6 = inlined_call_operand.vmem [shape: f32[1,256], index: 6, kind: input, shape index: {}]
  %s7 = inlined_call_operand.vmem [shape: f32[256,128], index: 7, kind: input, shape index: {}]
  %s8 = inlined_call_operand.vmem [shape: f32[1,128], index: 8, kind: input, shape index: {}]
  %s9 = inlined_call_operand.vmem [shape: f32[8,128], index: 9, kind: output, shape index: {}]
  %s10 = sld [smem:[#allocation0]]
  $region46: #{_lambda_.1} parent=0
    _
  %s12 = ssub.s32 1, %s10
  %s13 = scalar_select 0, %s12, %s10
  // Predicated region
  $region2: #{_lambda_.1} parent=0 // pred_check
    _
  $region3: #{_lambda_.1} parent=0 // pred_check_branch
    %15 = sbr.rel (0) target = $region5
  $region4: #{_lambda_.1} parent=0 // pred_region
    _
  $region5: #{_lambda_.1} parent=0 // pred_fallthru
    _
  // Predicated region
  $region6: #{_lambda_.1} parent=0 // pred_check
    _
  $region7: #{_lambda_.1} parent=0 // pred_check_branch
    %17 = sbr.rel (0) target = $region9
  $region8: #{_lambda_.1} parent=0 // pred_region
    _
  $region9: #{_lambda_.1} parent=0 // pred_fallthru
    _
  // Predicated region
  $region10: #{_lambda_.1} parent=0 // pred_check
    _
  $region11: #{_lambda_.1} parent=0 // pred_check_branch
    %19 = sbr.rel (0) target = $region13
  $region12: #{_lambda_.1} parent=0 // pred_region
    _
  $region13: #{_lambda_.1} parent=0 // pred_fallthru
    _
  // Predicated region
  $region14: #{_lambda_.1} parent=0 // pred_check
    _
  $region15: #{_lambda_.1} parent=0 // pred_check_branch
    %21 = sbr.rel (0) target = $region17
  $region16: #{_lambda_.1} parent=0 // pred_region
    _
  $region17: #{_lambda_.1} parent=0 // pred_fallthru
    _
  // Predicated region
  $region18: #{_lambda_.1} parent=0 // pred_check
    _
  $region19: #{_lambda_.1} parent=0 // pred_check_branch
    %23 = sbr.rel (0) target = $region21
  $region20: #{_lambda_.1} parent=0 // pred_region
    _
  $region21: #{_lambda_.1} parent=0 // pred_fallthru
    _
  // Predicated region
  $region22: #{_lambda_.1} parent=0 // pred_check
    _
  $region23: #{_lambda_.1} parent=0 // pred_check_branch
    %25 = sbr.rel (0) target = $region25
  $region24: #{_lambda_.1} parent=0 // pred_region
    _
  $region25: #{_lambda_.1} parent=0 // pred_fallthru
    _
  // Predicated region
  $region26: #{_lambda_.1} parent=0 // pred_check
    _
  $region27: #{_lambda_.1} parent=0 // pred_check_branch
    %27 = sbr.rel (0) target = $region29
  $region28: #{_lambda_.1} parent=0 // pred_region
    _
  $region29: #{_lambda_.1} parent=0 // pred_fallthru
    _
  // Predicated region
  $region30: #{_lambda_.1} parent=0 // pred_check
    _
  $region31: #{_lambda_.1} parent=0 // pred_check_branch
    %29 = sbr.rel (0) target = $region33
  $region32: #{_lambda_.1} parent=0 // pred_region
    _
  $region33: #{_lambda_.1} parent=0 // pred_fallthru
    _
  // Predicated region
  $region34: #{_lambda_.1} parent=0 // pred_check
    _
  $region35: #{_lambda_.1} parent=0 // pred_check_branch
    %31 = sbr.rel (0) target = $region37
  $region36: #{_lambda_.1} parent=0 // pred_region
    _
  $region37: #{_lambda_.1} parent=0 // pred_fallthru
    _
  %v32 = vld [vmem:[%s0] sm:$0xff]
  %v33 = vld [vmem:[%s1] sm:$0x1]
  %v35 = vlaneseq
  %v36 = vshrl.u32 %v35, 7
  %v37 = vsub.s32 0, %v36
  %v38 = vrot.slane %v33, %v37
  %v40 = vmul.f32 %v32, %v38
  %v41 = vld [vmem:[%s2] sm:$0x1]
  %v43 = vlaneseq
  %v44 = vshrl.u32 %v43, 7
  %v45 = vsub.s32 0, %v44
  %v46 = vrot.slane %v41, %v45
  %v48 = vadd.f32 %v40, %v46
  %v49 = vld [vmem:[%s3] sm:$0xff]
  %v50 = vld [vmem:[%s3 + $0x8] sm:$0xff]
  %v51 = vld [vmem:[%s3 + $0x10] sm:$0xff]
  %v52 = vld [vmem:[%s3 + $0x18] sm:$0xff]
  %v53 = vld [vmem:[%s3 + $0x20] sm:$0xff]
  %v54 = vld [vmem:[%s3 + $0x28] sm:$0xff]
  %v55 = vld [vmem:[%s3 + $0x30] sm:$0xff]
  %v56 = vld [vmem:[%s3 + $0x38] sm:$0xff]
  %v57 = vld [vmem:[%s4] sm:$0x3]
  %v59 = vlaneseq
  %v60 = vshrl.u32 %v59, 7
  %v61 = vsub.s32 0, %v60
  %v62 = vrot.slane %v57, %v61
  %v63 = vlaneseq
  %v64 = vshrl.u32 %v63, 7
  %v65 = vsub.s32 1, %v64
  %v66 = vrot.slane %v57, %v65
  %vm69 = vcmask 261120
  %v71 = vsel %vm69, %v48, 0
  %73 = vmatprep.subr.mxu0 %v50
  %74 = vmatpush1.msra.mxu0 %v49
  %75 = vmatprep.subr.mxu0 %v52
  %76 = vmatpush1.msra.mxu0 %v51
  %77 = vmatprep.subr.mxu0 %v54
  %78 = vmatpush1.msra.mxu0 %v53
  %79 = vmatprep.subr.mxu0 %v56
  %80 = vmatpush1.msra.mxu0 %v55
  %81 = vmatprep.subr.mxu0 0.0
  %82 = vmatpush1.msra.mxu0 0.0
  %83 = vmatprep.subr.mxu0 0.0
  %84 = vmatpush1.msra.mxu0 0.0
  %85 = vmatprep.subr.mxu0 0.0
  %86 = vmatpush1.msra.mxu0 0.0
  %87 = vmatprep.subr.mxu0 0.0
  %88 = vmatpush1.msra.mxu0 0.0
  %89 = vmatprep.subr.mxu0 0.0
  %90 = vmatpush1.msra.mxu0 0.0
  %91 = vmatprep.subr.mxu0 0.0
  %92 = vmatpush1.msra.mxu0 0.0
  %93 = vmatprep.subr.mxu0 0.0
  %94 = vmatpush1.msra.mxu0 0.0
  %95 = vmatprep.subr.mxu0 0.0
  %96 = vmatpush1.msra.mxu0 0.0
  %97 = vmatprep.subr.mxu0 0.0
  %98 = vmatpush1.msra.mxu0 0.0
  %99 = vmatprep.subr.mxu0 0.0
  %100 = vmatpush1.msra.mxu0 0.0
  %101 = vmatprep.subr.mxu0 0.0
  %102 = vmatpush1.msra.mxu0 0.0
  %103 = vmatprep.subr.mxu0 0.0
  %104 = vmatpush1.msra.mxu0 0.0
  %105 = vmatprep.subr.mxu0 0.0
  %106 = vmatpush1.msra.mxu0 0.0
  %107 = vmatprep.subr.mxu0 0.0
  %108 = vmatpush1.msra.mxu0 0.0
  %109 = vmatprep.subr.mxu0 0.0
  %110 = vmatpush1.msra.mxu0 0.0
  %111 = vmatprep.subr.mxu0 0.0
  %112 = vmatpush1.msra.mxu0 0.0
  %113 = vmatprep.subr.mxu0 0.0
  %114 = vmatpush1.msra.mxu0 0.0
  %115 = vmatprep.subr.mxu0 0.0
  %116 = vmatpush1.msra.mxu0 0.0
  %117 = vmatprep.subr.mxu0 0.0
  %118 = vmatpush1.msra.mxu0 0.0
  %119 = vmatprep.subr.mxu0 0.0
  %120 = vmatpush1.msra.mxu0 0.0
  %121 = vmatprep.subr.mxu0 0.0
  %122 = vmatpush1.msra.mxu0 0.0
  %123 = vmatprep.subr.mxu0 0.0
  %124 = vmatpush1.msra.mxu0 0.0
  %125 = vmatprep.subr.mxu0 0.0
  %126 = vmatpush1.msra.mxu0 0.0
  %127 = vmatprep.subr.mxu0 0.0
  %128 = vmatpush1.msra.mxu0 0.0
  %129 = vmatprep.subr.mxu0 0.0
  %130 = vmatpush1.msra.mxu0 0.0
  %131 = vmatprep.subr.mxu0 0.0
  %132 = vmatpush1.msra.mxu0 0.0
  %133 = vmatprep.subr.mxu0 0.0
  %134 = vmatpush1.msra.mxu0 0.0
  %135 = vmatprep.subr.mxu0 0.0
  %136 = vmatpush1.msra.mxu0 0.0
  %137 = vmatprep.mubr.f32.mxu0 0.0
  %138 = vmatmul.mubr.f32.gmra.mrb[0].mxu0 %v71
  %v139 = vpop.f32.mrb[0].mxu0
  %v140 = vadd.f32 %v62, %v139
  %v141 = vpop.f32.mrb[0].mxu0
  %v142 = vadd.f32 %v66, %v141
  %143 = vdwg.mxu0
  %vm144 = vcmp.gt.f32.partialorder %v140, 0.0
  %vm145 = vcmp.gt.f32.partialorder %v142, 0.0
  %v146 = vmul.f32 %v140, 0.01
  %v147 = vmul.f32 %v142, 0.01
  %v148 = vsel %vm144, %v140, %v146
  %v149 = vsel %vm145, %v142, %v147
  %v150 = vld [vmem:[%s5] sm:$0xff]
  %v151 = vld [vmem:[%s5 + $0x8] sm:$0xff]
  %v152 = vld [vmem:[%s5 + $0x10] sm:$0xff]
  %v153 = vld [vmem:[%s5 + $0x18] sm:$0xff]
  %v154 = vld [vmem:[%s5 + $0x20] sm:$0xff]
  %v155 = vld [vmem:[%s5 + $0x28] sm:$0xff]
  %v156 = vld [vmem:[%s5 + $0x30] sm:$0xff]
  %v157 = vld [vmem:[%s5 + $0x38] sm:$0xff]
  %v158 = vld [vmem:[%s5 + $0x40] sm:$0xff]
  %v159 = vld [vmem:[%s5 + $0x48] sm:$0xff]
  %v160 = vld [vmem:[%s5 + $0x50] sm:$0xff]
  %v161 = vld [vmem:[%s5 + $0x58] sm:$0xff]
  %v162 = vld [vmem:[%s5 + $0x60] sm:$0xff]
  %v163 = vld [vmem:[%s5 + $0x68] sm:$0xff]
  %v164 = vld [vmem:[%s5 + $0x70] sm:$0xff]
  %v165 = vld [vmem:[%s5 + $0x78] sm:$0xff]
  %v166 = vld [vmem:[%s5 + $0x80] sm:$0xff]
  %v167 = vld [vmem:[%s5 + $0x88] sm:$0xff]
  %v168 = vld [vmem:[%s5 + $0x90] sm:$0xff]
  %v169 = vld [vmem:[%s5 + $0x98] sm:$0xff]
  %v170 = vld [vmem:[%s5 + $0xa0] sm:$0xff]
  %v171 = vld [vmem:[%s5 + $0xa8] sm:$0xff]
  %v172 = vld [vmem:[%s5 + $0xb0] sm:$0xff]
  %v173 = vld [vmem:[%s5 + $0xb8] sm:$0xff]
  %v174 = vld [vmem:[%s5 + $0xc0] sm:$0xff]
  %v175 = vld [vmem:[%s5 + $0xc8] sm:$0xff]
  %v176 = vld [vmem:[%s5 + $0xd0] sm:$0xff]
  %v177 = vld [vmem:[%s5 + $0xd8] sm:$0xff]
  %v178 = vld [vmem:[%s5 + $0xe0] sm:$0xff]
  %v179 = vld [vmem:[%s5 + $0xe8] sm:$0xff]
  %v180 = vld [vmem:[%s5 + $0xf0] sm:$0xff]
  %v181 = vld [vmem:[%s5 + $0xf8] sm:$0xff]
  %v182 = vld [vmem:[%s5 + $0x100] sm:$0xff]
  %v183 = vld [vmem:[%s5 + $0x108] sm:$0xff]
  %v184 = vld [vmem:[%s5 + $0x110] sm:$0xff]
  %v185 = vld [vmem:[%s5 + $0x118] sm:$0xff]
  %v186 = vld [vmem:[%s5 + $0x120] sm:$0xff]
  %v187 = vld [vmem:[%s5 + $0x128] sm:$0xff]
  %v188 = vld [vmem:[%s5 + $0x130] sm:$0xff]
  %v189 = vld [vmem:[%s5 + $0x138] sm:$0xff]
  %v190 = vld [vmem:[%s5 + $0x140] sm:$0xff]
  %v191 = vld [vmem:[%s5 + $0x148] sm:$0xff]
  %v192 = vld [vmem:[%s5 + $0x150] sm:$0xff]
  %v193 = vld [vmem:[%s5 + $0x158] sm:$0xff]
  %v194 = vld [vmem:[%s5 + $0x160] sm:$0xff]
  %v195 = vld [vmem:[%s5 + $0x168] sm:$0xff]
  %v196 = vld [vmem:[%s5 + $0x170] sm:$0xff]
  %v197 = vld [vmem:[%s5 + $0x178] sm:$0xff]
  %v198 = vld [vmem:[%s5 + $0x180] sm:$0xff]
  %v199 = vld [vmem:[%s5 + $0x188] sm:$0xff]
  %v200 = vld [vmem:[%s5 + $0x190] sm:$0xff]
  %v201 = vld [vmem:[%s5 + $0x198] sm:$0xff]
  %v202 = vld [vmem:[%s5 + $0x1a0] sm:$0xff]
  %v203 = vld [vmem:[%s5 + $0x1a8] sm:$0xff]
  %v204 = vld [vmem:[%s5 + $0x1b0] sm:$0xff]
  %v205 = vld [vmem:[%s5 + $0x1b8] sm:$0xff]
  %v206 = vld [vmem:[%s5 + $0x1c0] sm:$0xff]
  %v207 = vld [vmem:[%s5 + $0x1c8] sm:$0xff]
  %v208 = vld [vmem:[%s5 + $0x1d0] sm:$0xff]
  %v209 = vld [vmem:[%s5 + $0x1d8] sm:$0xff]
  %v210 = vld [vmem:[%s5 + $0x1e0] sm:$0xff]
  %v211 = vld [vmem:[%s5 + $0x1e8] sm:$0xff]
  %v212 = vld [vmem:[%s5 + $0x1f0] sm:$0xff]
  %v213 = vld [vmem:[%s5 + $0x1f8] sm:$0xff]
  %v214 = vld [vmem:[%s6] sm:$0x3]
  %v216 = vlaneseq
  %v217 = vshrl.u32 %v216, 7
  %v218 = vsub.s32 0, %v217
  %v219 = vrot.slane %v214, %v218
  %v220 = vlaneseq
  %v221 = vshrl.u32 %v220, 7
  %v222 = vsub.s32 1, %v221
  %v223 = vrot.slane %v214, %v222
  %226 = vmatprep.subr.mxu0 %v151
  %227 = vmatpush1.msra.mxu0 %v150
  %228 = vmatprep.subr.mxu0 %v153
  %229 = vmatpush1.msra.mxu0 %v152
  %230 = vmatprep.subr.mxu0 %v155
  %231 = vmatpush1.msra.mxu0 %v154
  %232 = vmatprep.subr.mxu0 %v157
  %233 = vmatpush1.msra.mxu0 %v156
  %234 = vmatprep.subr.mxu0 %v159
  %235 = vmatpush1.msra.mxu0 %v158
  %236 = vmatprep.subr.mxu0 %v161
  %237 = vmatpush1.msra.mxu0 %v160
  %238 = vmatprep.subr.mxu0 %v163
  %239 = vmatpush1.msra.mxu0 %v162
  %240 = vmatprep.subr.mxu0 %v165
  %241 = vmatpush1.msra.mxu0 %v164
  %242 = vmatprep.subr.mxu0 %v167
  %243 = vmatpush1.msra.mxu0 %v166
  %244 = vmatprep.subr.mxu0 %v169
  %245 = vmatpush1.msra.mxu0 %v168
  %246 = vmatprep.subr.mxu0 %v171
  %247 = vmatpush1.msra.mxu0 %v170
  %248 = vmatprep.subr.mxu0 %v173
  %249 = vmatpush1.msra.mxu0 %v172
  %250 = vmatprep.subr.mxu0 %v175
  %251 = vmatpush1.msra.mxu0 %v174
  %252 = vmatprep.subr.mxu0 %v177
  %253 = vmatpush1.msra.mxu0 %v176
  %254 = vmatprep.subr.mxu0 %v179
  %255 = vmatpush1.msra.mxu0 %v178
  %256 = vmatprep.subr.mxu0 %v181
  %257 = vmatpush1.msra.mxu0 %v180
  %258 = vmatprep.subr.mxu0 %v183
  %259 = vmatpush1.msra.mxu0 %v182
  %260 = vmatprep.subr.mxu0 %v185
  %261 = vmatpush1.msra.mxu0 %v184
  %262 = vmatprep.subr.mxu0 %v187
  %263 = vmatpush1.msra.mxu0 %v186
  %264 = vmatprep.subr.mxu0 %v189
  %265 = vmatpush1.msra.mxu0 %v188
  %266 = vmatprep.subr.mxu0 %v191
  %267 = vmatpush1.msra.mxu0 %v190
  %268 = vmatprep.subr.mxu0 %v193
  %269 = vmatpush1.msra.mxu0 %v192
  %270 = vmatprep.subr.mxu0 %v195
  %271 = vmatpush1.msra.mxu0 %v194
  %272 = vmatprep.subr.mxu0 %v197
  %273 = vmatpush1.msra.mxu0 %v196
  %274 = vmatprep.subr.mxu0 %v199
  %275 = vmatpush1.msra.mxu0 %v198
  %276 = vmatprep.subr.mxu0 %v201
  %277 = vmatpush1.msra.mxu0 %v200
  %278 = vmatprep.subr.mxu0 %v203
  %279 = vmatpush1.msra.mxu0 %v202
  %280 = vmatprep.subr.mxu0 %v205
  %281 = vmatpush1.msra.mxu0 %v204
  %282 = vmatprep.subr.mxu0 %v207
  %283 = vmatpush1.msra.mxu0 %v206
  %284 = vmatprep.subr.mxu0 %v209
  %285 = vmatpush1.msra.mxu0 %v208
  %286 = vmatprep.subr.mxu0 %v211
  %287 = vmatpush1.msra.mxu0 %v210
  %288 = vmatprep.subr.mxu0 %v213
  %289 = vmatpush1.msra.mxu0 %v212
  %290 = vmatprep.mubr.f32.mxu0 %v149
  %291 = vmatmul.mubr.f32.gmra.mrb[0].mxu0 %v148
  %v292 = vpop.f32.mrb[0].mxu0
  %v293 = vadd.f32 %v219, %v292
  %v294 = vpop.f32.mrb[0].mxu0
  %v295 = vadd.f32 %v223, %v294
  %296 = vdwg.mxu0
  %vm297 = vcmp.gt.f32.partialorder %v293, 0.0
  %vm298 = vcmp.gt.f32.partialorder %v295, 0.0
  %v299 = vmul.f32 %v293, 0.01
  %v300 = vmul.f32 %v295, 0.01
  %v301 = vsel %vm297, %v293, %v299
  %v302 = vsel %vm298, %v295, %v300
  %v303 = vld [vmem:[%s7] sm:$0xff]
  %v304 = vld [vmem:[%s7 + $0x8] sm:$0xff]
  %v305 = vld [vmem:[%s7 + $0x10] sm:$0xff]
  %v306 = vld [vmem:[%s7 + $0x18] sm:$0xff]
  %v307 = vld [vmem:[%s7 + $0x20] sm:$0xff]
  %v308 = vld [vmem:[%s7 + $0x28] sm:$0xff]
  %v309 = vld [vmem:[%s7 + $0x30] sm:$0xff]
  %v310 = vld [vmem:[%s7 + $0x38] sm:$0xff]
  %v311 = vld [vmem:[%s7 + $0x40] sm:$0xff]
  %v312 = vld [vmem:[%s7 + $0x48] sm:$0xff]
  %v313 = vld [vmem:[%s7 + $0x50] sm:$0xff]
  %v314 = vld [vmem:[%s7 + $0x58] sm:$0xff]
  %v315 = vld [vmem:[%s7 + $0x60] sm:$0xff]
  %v316 = vld [vmem:[%s7 + $0x68] sm:$0xff]
  %v317 = vld [vmem:[%s7 + $0x70] sm:$0xff]
  %v318 = vld [vmem:[%s7 + $0x78] sm:$0xff]
  %v319 = vld [vmem:[%s7 + $0x80] sm:$0xff]
  %v320 = vld [vmem:[%s7 + $0x88] sm:$0xff]
  %v321 = vld [vmem:[%s7 + $0x90] sm:$0xff]
  %v322 = vld [vmem:[%s7 + $0x98] sm:$0xff]
  %v323 = vld [vmem:[%s7 + $0xa0] sm:$0xff]
  %v324 = vld [vmem:[%s7 + $0xa8] sm:$0xff]
  %v325 = vld [vmem:[%s7 + $0xb0] sm:$0xff]
  %v326 = vld [vmem:[%s7 + $0xb8] sm:$0xff]
  %v327 = vld [vmem:[%s7 + $0xc0] sm:$0xff]
  %v328 = vld [vmem:[%s7 + $0xc8] sm:$0xff]
  %v329 = vld [vmem:[%s7 + $0xd0] sm:$0xff]
  %v330 = vld [vmem:[%s7 + $0xd8] sm:$0xff]
  %v331 = vld [vmem:[%s7 + $0xe0] sm:$0xff]
  %v332 = vld [vmem:[%s7 + $0xe8] sm:$0xff]
  %v333 = vld [vmem:[%s7 + $0xf0] sm:$0xff]
  %v334 = vld [vmem:[%s7 + $0xf8] sm:$0xff]
  %v335 = vld [vmem:[%s8] sm:$0x1]
  %v337 = vlaneseq
  %v338 = vshrl.u32 %v337, 7
  %v339 = vsub.s32 0, %v338
  %v340 = vrot.slane %v335, %v339
  %342 = vmatprep.subr.mxu0 0.0
  %343 = vmatpush1.msra.mxu0 %v303
  %344 = vmatprep.subr.mxu0 0.0
  %345 = vmatpush1.msra.mxu0 %v304
  %346 = vmatprep.subr.mxu0 0.0
  %347 = vmatpush1.msra.mxu0 %v305
  %348 = vmatprep.subr.mxu0 0.0
  %349 = vmatpush1.msra.mxu0 %v306
  %350 = vmatprep.subr.mxu0 0.0
  %351 = vmatpush1.msra.mxu0 %v307
  %352 = vmatprep.subr.mxu0 0.0
  %353 = vmatpush1.msra.mxu0 %v308
  %354 = vmatprep.subr.mxu0 0.0
  %355 = vmatpush1.msra.mxu0 %v309
  %356 = vmatprep.subr.mxu0 0.0
  %357 = vmatpush1.msra.mxu0 %v310
  %358 = vmatprep.subr.mxu0 0.0
  %359 = vmatpush1.msra.mxu0 %v311
  %360 = vmatprep.subr.mxu0 0.0
  %361 = vmatpush1.msra.mxu0 %v312
  %362 = vmatprep.subr.mxu0 0.0
  %363 = vmatpush1.msra.mxu0 %v313
  %364 = vmatprep.subr.mxu0 0.0
  %365 = vmatpush1.msra.mxu0 %v314
  %366 = vmatprep.subr.mxu0 0.0
  %367 = vmatpush1.msra.mxu0 %v315
  %368 = vmatprep.subr.mxu0 0.0
  %369 = vmatpush1.msra.mxu0 %v316
  %370 = vmatprep.subr.mxu0 0.0
  %371 = vmatpush1.msra.mxu0 %v317
  %372 = vmatprep.subr.mxu0 0.0
  %373 = vmatpush1.msra.mxu0 %v318
  %374 = vmatprep.subr.mxu0 0.0
  %375 = vmatpush1.msra.mxu0 %v319
  %376 = vmatprep.subr.mxu0 0.0
  %377 = vmatpush1.msra.mxu0 %v320
  %378 = vmatprep.subr.mxu0 0.0
  %379 = vmatpush1.msra.mxu0 %v321
  %380 = vmatprep.subr.mxu0 0.0
  %381 = vmatpush1.msra.mxu0 %v322
  %382 = vmatprep.subr.mxu0 0.0
  %383 = vmatpush1.msra.mxu0 %v323
  %384 = vmatprep.subr.mxu0 0.0
  %385 = vmatpush1.msra.mxu0 %v324
  %386 = vmatprep.subr.mxu0 0.0
  %387 = vmatpush1.msra.mxu0 %v325
  %388 = vmatprep.subr.mxu0 0.0
  %389 = vmatpush1.msra.mxu0 %v326
  %390 = vmatprep.subr.mxu0 0.0
  %391 = vmatpush1.msra.mxu0 %v327
  %392 = vmatprep.subr.mxu0 0.0
  %393 = vmatpush1.msra.mxu0 %v328
  %394 = vmatprep.subr.mxu0 0.0
  %395 = vmatpush1.msra.mxu0 %v329
  %396 = vmatprep.subr.mxu0 0.0
  %397 = vmatpush1.msra.mxu0 %v330
  %398 = vmatprep.subr.mxu0 0.0
  %399 = vmatpush1.msra.mxu0 %v331
  %400 = vmatprep.subr.mxu0 0.0
  %401 = vmatpush1.msra.mxu0 %v332
  %402 = vmatprep.subr.mxu0 0.0
  %403 = vmatpush1.msra.mxu0 %v333
  %404 = vmatprep.subr.mxu0 0.0
  %405 = vmatpush1.msra.mxu0 %v334
  %406 = vmatprep.mubr.f32.mxu0 %v302
  %407 = vmatmul.mubr.f32.gmra.mrb[0].mxu0 %v301
  %v408 = vpop.f32.mrb[0].mxu0
  %v409 = vadd.f32 %v340, %v408
  %v410 = vpop.f32.mrb[0].mxu0
  %411 = vdwg.mxu0
  %412 = vst [vmem:[%s9] sm:$0xff] %v409
  // Predicated region
  $region38: #{_lambda_.1} parent=0 // pred_check
    _
  $region39: #{_lambda_.1} parent=0 // pred_check_branch
    %414 = sbr.rel (0) target = $region41
  $region40: #{_lambda_.1} parent=0 // pred_region
    _
  $region41: #{_lambda_.1} parent=0 // pred_fallthru
    _
  // Predicated region
  $region42: #{_lambda_.1} parent=0 // pred_check
    _
  $region43: #{_lambda_.1} parent=0 // pred_check_branch
    %416 = sbr.rel (0) target = $region45
  $region44: #{_lambda_.1} parent=0 // pred_region
    _
  $region45: #{_lambda_.1} parent=0 // pred_fallthru
    _

</llo_original>
